<compile_context>
chip_gen: v5e
topology: v5e:2x2
jax: 0.10.0
libtpu: 0.0.40
codegen_flags: <defaults>
</compile_context>

<pallas_src>
import jax
import jax.numpy as jnp
from jax import lax
from jax.experimental import pallas as pl
from jax.experimental.pallas import tpu as pltpu  # noqa: F401  (kept for parity / future tiling)

# ---- synthetic config (mirrors GloveLSTMCRF __init__) ----
VOCAB = 50          # glove vocab (synthetic)
TOKEN_EMB = 16      # token_emb_dim
POS_VOCAB = 10      # pos vocab size
POS_EMB = 8         # pos_emb_dim
EMB = TOKEN_EMB + POS_EMB          # 24
HID = 32            # lstm_hidden_dim (4*HID = 128, lane aligned)
NLABEL = 5          # label_size
LPAD = 128          # lane-dense padded label dim (sliced back to NLABEL in the wrapper)
B = 2               # batch
T = 8               # n_ctx (seq_size)
B2 = 2 * B          # fwd + bwd rows per timestep
ROWS = 8            # per-timestep row block, padded to a full sublane tile
PAD_TOKEN_ID = 0
PAD_POS_ID = 0
# TODO(synk): kernel stays fully VMEM-resident (~0.1 MB); re-tile / shard by batch only if
#             shapes ever scale toward the 64 MiB v7x VMEM budget.


def bilstm_head_kernel(x_ref, mblk_ref, m1_ref, b_ref, wih_ref, whh_ref,
                       whead_ref, p_ref, bl_ref, out_ref):
    """Fused bidirectional masked LSTM + linear head, fully VMEM-resident, grid-less."""
    H = HID
    H2 = 2 * H

    # --- input projection for ALL timesteps & both directions: one matmul ---
    # x rows are block-diagonal over directions ([x_t | 0] fwd, [0 | x_{T-1-t}] bwd).
    gx = jnp.dot(x_ref[...], wih_ref[...],
                 preferred_element_type=jnp.float32)          # (T*ROWS, 4H)

    mblk = mblk_ref[...]      # (T*ROWS, 2H): mask * block-diagonal pattern (pads = 0)
    m1 = m1_ref[...]          # (T*ROWS, H):  plain per-row mask (pads = 0)
    b_v = b_ref[...]          # (ROWS, 4H):   per-direction bias rows
    w_hh = whh_ref[...]       # (2H, 4H):     stacked [w_hh_f ; w_hh_b]

    # block-diagonal state: fwd rows carry h in lanes 0:H, bwd rows in lanes H:2H, pads zero
    h_blk = jnp.zeros((ROWS, H2), jnp.float32)
    c = jnp.zeros((ROWS, H), jnp.float32)

    out_steps = []
    for s in range(T):                                        # fully unrolled (T static)
        r0 = s * ROWS                                         # multiple of 8 -> aligned tiles
        gx_s = gx[r0:r0 + ROWS, :]                            # (8, 4H) full vreg tile
        mb_s = mblk[r0:r0 + ROWS, :]                          # (8, 2H)
        m1_s = m1[r0:r0 + ROWS, :]                            # (8, H)

        # single 128-wide recurrent matmul; no post-select needed
        gates = gx_s + b_v + jnp.dot(h_blk, w_hh,
                                     preferred_element_type=jnp.float32)   # (8, 4H)

        # PyTorch gate order i, f, g, o — one wide sigmoid pass, slice i/f/o out of it
        sig = jax.nn.sigmoid(gates)
        i_g = sig[:, 0:H]
        f_g = sig[:, H:2 * H]
        o_g = sig[:, 3 * H:4 * H]
        g_g = jnp.tanh(gates[:, 2 * H:3 * H])

        c_new = f_g * c + i_g * g_g
        h_new = o_g * jnp.tanh(c_new)

        # pack_padded_sequence emulation: padded steps emit zeros and do not update state.
        # mb_s already folds in the block-diagonal pattern, so out2 is block-structured.
        out2 = mb_s * jnp.concatenate([h_new, h_new], axis=-1)    # (8, 2H)
        h_blk = h_blk - mb_s * h_blk + out2                       # (1-m)*h_prev + m*h_new
        c = c + m1_s * (c_new - c)
        out_steps.append(out2)

    # --- head: aligned concat of 8 full (8, 2H) tiles, constant row-gather/sum matmul P
    #     (fwd@t + bwd@(T-1-t) -> head row (t, b)), then ONE dense lane-dense head matmul ---
    out_all = jnp.concatenate(out_steps, axis=0)                           # (T*ROWS, 2H)
    z = jnp.dot(p_ref[...], out_all, preferred_element_type=jnp.float32)   # (T*B, 2H)
    out_ref[...] = (jnp.dot(z, whead_ref[...], preferred_element_type=jnp.float32)
                    + bl_ref[...])                                         # (T*B, 128)


def glove_lstm_forward(token_ids, pos_ids, params):
    # plain-JAX glue: embedding gathers + layout plumbing (no compute hoisted out of the kernel)
    tok_emb = jnp.take(params['embed_token'], token_ids, axis=0)   # (B, T, TOKEN_EMB)
    pos_emb = jnp.take(params['embed_pos'], pos_ids, axis=0)       # (B, T, POS_EMB)
    embed = jnp.concatenate([tok_emb, pos_emb], axis=-1)           # (B, T, E)
    # dropout: eval mode -> identity
    mask = (token_ids != PAD_TOKEN_ID).astype(jnp.float32)         # (B, T)

    x_tm = jnp.transpose(embed, (1, 0, 2)).astype(jnp.float32)     # (T, B, E)
    m_tm = jnp.transpose(mask, (1, 0))                             # (T, B)

    # direction-stacked, time-major rows; block-diagonal [fwd | bwd] features; pad to 8 rows/step
    zeros_e = jnp.zeros_like(x_tm)
    x_fwd = jnp.concatenate([x_tm, zeros_e], axis=-1)              # (T, B, 2E): [x_t | 0]
    x_bwd = jnp.concatenate([zeros_e, x_tm[::-1]], axis=-1)        # (T, B, 2E): [0 | x_{T-1-t}]
    x_pad = jnp.zeros((T, ROWS - B2, 2 * EMB), jnp.float32)
    x2d = jnp.concatenate([x_fwd, x_bwd, x_pad], axis=1).reshape(T * ROWS, 2 * EMB)

    # masks: mblk folds mask * block-diagonal pattern (for h / outputs), m1 is the plain mask (for c)
    m_f = jnp.broadcast_to(m_tm[:, :, None], (T, B, HID))
    m_b = jnp.broadcast_to(m_tm[::-1][:, :, None], (T, B, HID))
    z_h = jnp.zeros((T, B, HID), jnp.float32)
    mblk = jnp.concatenate([jnp.concatenate([m_f, z_h], axis=-1),
                            jnp.concatenate([z_h, m_b], axis=-1),
                            jnp.zeros((T, ROWS - B2, 2 * HID), jnp.float32)],
                           axis=1).reshape(T * ROWS, 2 * HID)
    m1 = jnp.concatenate([m_f, m_b, jnp.zeros((T, ROWS - B2, HID), jnp.float32)],
                         axis=1).reshape(T * ROWS, HID)

    # per-row direction bias (single 8x4H tile; pad rows are masked anyway)
    b_stk = jnp.concatenate([jnp.broadcast_to(params['b_f'], (B, 4 * HID)),
                             jnp.broadcast_to(params['b_b'], (B, 4 * HID)),
                             jnp.zeros((ROWS - B2, 4 * HID), jnp.float32)], axis=0)

    w_ih_blk = jnp.concatenate([params['w_ih_f'], params['w_ih_b']], axis=0)   # (2E, 4H)
    w_hh_stk = jnp.concatenate([params['w_hh_f'], params['w_hh_b']], axis=0)   # (2H, 4H)

    # lane-dense (128-wide) head weight / bias; extra columns zero, sliced off below
    w_head = jnp.zeros((2 * HID, LPAD), jnp.float32).at[:, :NLABEL].set(params['w_lin'])
    bl = jnp.zeros((1, LPAD), jnp.float32).at[:, :NLABEL].set(params['b_lin'])

    # constant row-gather/sum matrix: head row (t, b) <- fwd row (t*ROWS + b) + bwd row
    # ((T-1-t)*ROWS + B + b) of the kernel's per-step output slab
    rows = jnp.arange(T * B)
    t_idx = rows // B
    b_idx = rows % B
    cols = jnp.arange(T * ROWS)
    p_fwd = cols[None, :] == (t_idx * ROWS + b_idx)[:, None]
    p_bwd = cols[None, :] == ((T - 1 - t_idx) * ROWS + B + b_idx)[:, None]
    p_mat = (p_fwd | p_bwd).astype(jnp.float32)                    # (T*B, T*ROWS)

    out = pl.pallas_call(
        bilstm_head_kernel,
        out_shape=jax.ShapeDtypeStruct((T * B, LPAD), jnp.float32),
    )(x2d, mblk, m1, b_stk, w_ih_blk, w_hh_stk, w_head, p_mat, bl)

    logits = out.reshape(T, B, LPAD)[:, :, :NLABEL]                # drop lane padding
    return jnp.transpose(logits, (1, 0, 2))                        # (B, T, L) — PyTorch layout


# ---------------- pure-JAX reference (for a correctness check) ----------------
def _lstm_dir_ref(x_tbe, m_tb1, w_ih, w_hh, b, reverse):
    if reverse:
        x_tbe = x_tbe[::-1]
        m_tb1 = m_tb1[::-1]

    def step(carry, inp):
        h, c = carry
        x_t, m = inp
        gates = x_t @ w_ih + h @ w_hh + b
        i_g = jax.nn.sigmoid(gates[:, :HID])
        f_g = jax.nn.sigmoid(gates[:, HID:2 * HID])
        g_g = jnp.tanh(gates[:, 2 * HID:3 * HID])
        o_g = jax.nn.sigmoid(gates[:, 3 * HID:])
        c_new = f_g * c + i_g * g_g
        h_new = o_g * jnp.tanh(c_new)
        out = m * h_new
        h = m * h_new + (1.0 - m) * h
        c = m * c_new + (1.0 - m) * c
        return (h, c), out

    init = (jnp.zeros((B, HID), jnp.float32), jnp.zeros((B, HID), jnp.float32))
    _, outs = lax.scan(step, init, (x_tbe, m_tb1))
    if reverse:
        outs = outs[::-1]
    return outs


def reference_forward(token_ids, pos_ids, params):
    tok_emb = jnp.take(params['embed_token'], token_ids, axis=0)
    pos_emb = jnp.take(params['embed_pos'], pos_ids, axis=0)
    embed = jnp.concatenate([tok_emb, pos_emb], axis=-1)
    mask = (token_ids != PAD_TOKEN_ID).astype(jnp.float32)
    x = jnp.transpose(embed, (1, 0, 2)).astype(jnp.float32)
    m = jnp.transpose(mask, (1, 0))[:, :, None]
    fwd = _lstm_dir_ref(x, m, params['w_ih_f'], params['w_hh_f'], params['b_f'], False)
    bwd = _lstm_dir_ref(x, m, params['w_ih_b'], params['w_hh_b'], params['b_b'], True)
    lstm_out = jnp.concatenate([fwd, bwd], axis=-1)                    # (T, B, 2H)
    logits = lstm_out @ params['w_lin'] + params['b_lin']              # (T, B, L)
    return jnp.transpose(logits, (1, 0, 2))


# ---------------- deterministic parameter init ----------------
def init_params(key):
    ks = jax.random.split(key, 12)
    embed_token = 0.1 * jax.random.normal(ks[0], (VOCAB, TOKEN_EMB), jnp.float32)
    embed_token = embed_token.at[PAD_TOKEN_ID].set(0.0)
    embed_pos = 0.1 * jax.random.normal(ks[1], (POS_VOCAB, POS_EMB), jnp.float32)
    embed_pos = embed_pos.at[PAD_POS_ID].set(0.0)

    k = 1.0 / (HID ** 0.5)

    def u(kk, shape):
        return jax.random.uniform(kk, shape, jnp.float32, -k, k)

    # PyTorch LSTM weights are (4H, E)/(4H, H); we store transposed for x @ W
    w_ih_f = u(ks[2], (EMB, 4 * HID))
    w_hh_f = u(ks[3], (HID, 4 * HID))
    b_f = u(ks[4], (1, 4 * HID)) + u(ks[5], (1, 4 * HID))   # b_ih + b_hh
    w_ih_b = u(ks[6], (EMB, 4 * HID))
    w_hh_b = u(ks[7], (HID, 4 * HID))
    b_b = u(ks[8], (1, 4 * HID)) + u(ks[9], (1, 4 * HID))

    kl = 1.0 / ((2 * HID) ** 0.5)
    w_lin = jax.random.uniform(ks[10], (2 * HID, NLABEL), jnp.float32, -kl, kl)
    b_lin = jax.random.uniform(ks[11], (1, NLABEL), jnp.float32, -kl, kl)

    return dict(embed_token=embed_token, embed_pos=embed_pos,
                w_ih_f=w_ih_f, w_hh_f=w_hh_f, b_f=b_f,
                w_ih_b=w_ih_b, w_hh_b=w_hh_b, b_b=b_b,
                w_lin=w_lin, b_lin=b_lin)


if __name__ == "__main__":
    root = jax.random.PRNGKey(0)
    kp, kt, kpos = jax.random.split(root, 3)
    params = init_params(kp)

    # right-padded sequences (lengths 8 and 5), pad id = 0
    lengths = jnp.array([T, 5], dtype=jnp.int32)
    token_ids = jax.random.randint(kt, (B, T), 1, VOCAB, dtype=jnp.int32)
    pos_ids = jax.random.randint(kpos, (B, T), 1, POS_VOCAB, dtype=jnp.int32)
    valid = jnp.arange(T)[None, :] < lengths[:, None]
    token_ids = jnp.where(valid, token_ids, PAD_TOKEN_ID)
    pos_ids = jnp.where(valid, pos_ids, PAD_POS_ID)

    logits = glove_lstm_forward(token_ids, pos_ids, params)
    logits = jax.block_until_ready(logits)

    ref = reference_forward(token_ids, pos_ids, params)
    assert logits.shape == (B, T, NLABEL), logits.shape
    assert bool(jnp.all(jnp.isfinite(logits)))
    max_err = float(jnp.max(jnp.abs(logits - ref)))
    assert max_err < 1e-3, f"mismatch vs reference: {max_err}"

    print("KERNEL_OK")
</pallas_src>

<mosaic_0001>
module attributes {stable_mosaic.version = 11 : i64} {
  func.func @bilstm_head_kernel(%arg0: memref<64x48xf32, #tpu.memory_space<vmem>>, %arg1: memref<64x64xf32, #tpu.memory_space<vmem>>, %arg2: memref<64x32xf32, #tpu.memory_space<vmem>>, %arg3: memref<8x128xf32, #tpu.memory_space<vmem>>, %arg4: memref<48x128xf32, #tpu.memory_space<vmem>>, %arg5: memref<64x128xf32, #tpu.memory_space<vmem>>, %arg6: memref<64x128xf32, #tpu.memory_space<vmem>>, %arg7: memref<16x64xf32, #tpu.memory_space<vmem>>, %arg8: memref<1x128xf32, #tpu.memory_space<vmem>>, %arg9: memref<16x128xf32, #tpu.memory_space<vmem>>) attributes {dimension_semantics = [], scalar_prefetch = 0 : i64, scratch_operands = 0 : i64, tpu.core_type = #tpu.core_type<tc>} {
    %c0 = arith.constant 0 : index
    %c0_0 = arith.constant 0 : index
    %0 = vector.load %arg0[%c0, %c0_0] : memref<64x48xf32, #tpu.memory_space<vmem>>, vector<64x48xf32>
    %c0_1 = arith.constant 0 : index
    %c0_2 = arith.constant 0 : index
    %1 = vector.load %arg4[%c0_1, %c0_2] : memref<48x128xf32, #tpu.memory_space<vmem>>, vector<48x128xf32>
    %cst = arith.constant dense<0.000000e+00> : vector<64x128xf32>
    %2 = tpu.matmul %0, %1, %cst {dimension_numbers = #tpu.dot_dimension_numbers<[1], [0], [0], [1], [0, 0, 1, 1], [], []>} : vector<64x48xf32>, vector<48x128xf32>, vector<64x128xf32> -> vector<64x128xf32>
    %c0_3 = arith.constant 0 : index
    %c0_4 = arith.constant 0 : index
    %3 = vector.load %arg1[%c0_3, %c0_4] : memref<64x64xf32, #tpu.memory_space<vmem>>, vector<64x64xf32>
    %c0_5 = arith.constant 0 : index
    %c0_6 = arith.constant 0 : index
    %4 = vector.load %arg2[%c0_5, %c0_6] : memref<64x32xf32, #tpu.memory_space<vmem>>, vector<64x32xf32>
    %c0_7 = arith.constant 0 : index
    %c0_8 = arith.constant 0 : index
    %5 = vector.load %arg3[%c0_7, %c0_8] : memref<8x128xf32, #tpu.memory_space<vmem>>, vector<8x128xf32>
    %c0_9 = arith.constant 0 : index
    %c0_10 = arith.constant 0 : index
    %6 = vector.load %arg5[%c0_9, %c0_10] : memref<64x128xf32, #tpu.memory_space<vmem>>, vector<64x128xf32>
    %cst_11 = arith.constant 0.000000e+00 : f32
    %7 = vector.broadcast %cst_11 : f32 to vector<8x64xf32>
    %cst_12 = arith.constant 0.000000e+00 : f32
    %8 = vector.broadcast %cst_12 : f32 to vector<8x32xf32>
    %9 = vector.extract_strided_slice %2 {offsets = [0, 0], sizes = [8, 128], strides = [1, 1]} : vector<64x128xf32> to vector<8x128xf32>
    %10 = vector.extract_strided_slice %3 {offsets = [0, 0], sizes = [8, 64], strides = [1, 1]} : vector<64x64xf32> to vector<8x64xf32>
    %11 = vector.extract_strided_slice %4 {offsets = [0, 0], sizes = [8, 32], strides = [1, 1]} : vector<64x32xf32> to vector<8x32xf32>
    %12 = arith.addf %9, %5 : vector<8x128xf32>
    %cst_13 = arith.constant dense<0.000000e+00> : vector<8x128xf32>
    %13 = tpu.matmul %7, %6, %cst_13 {dimension_numbers = #tpu.dot_dimension_numbers<[1], [0], [0], [1], [0, 0, 1, 1], [], []>} : vector<8x64xf32>, vector<64x128xf32>, vector<8x128xf32> -> vector<8x128xf32>
    %14 = arith.addf %12, %13 : vector<8x128xf32>
    %15 = arith.negf %14 : vector<8x128xf32>
    %16 = math.exp %15 : vector<8x128xf32>
    %cst_14 = arith.constant 1.000000e+00 : f32
    %17 = vector.broadcast %cst_14 : f32 to vector<8x128xf32>
    %18 = arith.addf %17, %16 : vector<8x128xf32>
    %19 = arith.divf %17, %18 : vector<8x128xf32>
    %20 = vector.extract_strided_slice %19 {offsets = [0, 0], sizes = [8, 32], strides = [1, 1]} : vector<8x128xf32> to vector<8x32xf32>
    %21 = vector.extract_strided_slice %19 {offsets = [0, 32], sizes = [8, 32], strides = [1, 1]} : vector<8x128xf32> to vector<8x32xf32>
    %22 = vector.extract_strided_slice %19 {offsets = [0, 96], sizes = [8, 32], strides = [1, 1]} : vector<8x128xf32> to vector<8x32xf32>
    %23 = vector.extract_strided_slice %14 {offsets = [0, 64], sizes = [8, 32], strides = [1, 1]} : vector<8x128xf32> to vector<8x32xf32>
    %24 = math.tanh %23 : vector<8x32xf32>
    %25 = arith.mulf %21, %8 : vector<8x32xf32>
    %26 = arith.mulf %20, %24 : vector<8x32xf32>
    %27 = arith.addf %25, %26 : vector<8x32xf32>
    %28 = math.tanh %27 : vector<8x32xf32>
    %29 = arith.mulf %22, %28 : vector<8x32xf32>
    %30 = tpu.concatenate %29, %29 in 1 : vector<8x32xf32>, vector<8x32xf32> -> vector<8x64xf32>
    %31 = arith.mulf %10, %30 : vector<8x64xf32>
    %32 = arith.mulf %10, %7 : vector<8x64xf32>
    %33 = arith.subf %7, %32 : vector<8x64xf32>
    %34 = arith.addf %33, %31 : vector<8x64xf32>
    %35 = arith.subf %27, %8 : vector<8x32xf32>
    %36 = arith.mulf %11, %35 : vector<8x32xf32>
    %37 = arith.addf %8, %36 : vector<8x32xf32>
    %38 = vector.extract_strided_slice %2 {offsets = [8, 0], sizes = [8, 128], strides = [1, 1]} : vector<64x128xf32> to vector<8x128xf32>
    %39 = vector.extract_strided_slice %3 {offsets = [8, 0], sizes = [8, 64], strides = [1, 1]} : vector<64x64xf32> to vector<8x64xf32>
    %40 = vector.extract_strided_slice %4 {offsets = [8, 0], sizes = [8, 32], strides = [1, 1]} : vector<64x32xf32> to vector<8x32xf32>
    %41 = arith.addf %38, %5 : vector<8x128xf32>
    %cst_15 = arith.constant dense<0.000000e+00> : vector<8x128xf32>
    %42 = tpu.matmul %34, %6, %cst_15 {dimension_numbers = #tpu.dot_dimension_numbers<[1], [0], [0], [1], [0, 0, 1, 1], [], []>} : vector<8x64xf32>, vector<64x128xf32>, vector<8x128xf32> -> vector<8x128xf32>
    %43 = arith.addf %41, %42 : vector<8x128xf32>
    %44 = arith.negf %43 : vector<8x128xf32>
    %45 = math.exp %44 : vector<8x128xf32>
    %cst_16 = arith.constant 1.000000e+00 : f32
    %46 = vector.broadcast %cst_16 : f32 to vector<8x128xf32>
    %47 = arith.addf %46, %45 : vector<8x128xf32>
    %48 = arith.divf %46, %47 : vector<8x128xf32>
    %49 = vector.extract_strided_slice %48 {offsets = [0, 0], sizes = [8, 32], strides = [1, 1]} : vector<8x128xf32> to vector<8x32xf32>
    %50 = vector.extract_strided_slice %48 {offsets = [0, 32], sizes = [8, 32], strides = [1, 1]} : vector<8x128xf32> to vector<8x32xf32>
    %51 = vector.extract_strided_slice %48 {offsets = [0, 96], sizes = [8, 32], strides = [1, 1]} : vector<8x128xf32> to vector<8x32xf32>
    %52 = vector.extract_strided_slice %43 {offsets = [0, 64], sizes = [8, 32], strides = [1, 1]} : vector<8x128xf32> to vector<8x32xf32>
    %53 = math.tanh %52 : vector<8x32xf32>
    %54 = arith.mulf %50, %37 : vector<8x32xf32>
    %55 = arith.mulf %49, %53 : vector<8x32xf32>
    %56 = arith.addf %54, %55 : vector<8x32xf32>
    %57 = math.tanh %56 : vector<8x32xf32>
    %58 = arith.mulf %51, %57 : vector<8x32xf32>
    %59 = tpu.concatenate %58, %58 in 1 : vector<8x32xf32>, vector<8x32xf32> -> vector<8x64xf32>
    %60 = arith.mulf %39, %59 : vector<8x64xf32>
    %61 = arith.mulf %39, %34 : vector<8x64xf32>
    %62 = arith.subf %34, %61 : vector<8x64xf32>
    %63 = arith.addf %62, %60 : vector<8x64xf32>
    %64 = arith.subf %56, %37 : vector<8x32xf32>
    %65 = arith.mulf %40, %64 : vector<8x32xf32>
    %66 = arith.addf %37, %65 : vector<8x32xf32>
    %67 = vector.extract_strided_slice %2 {offsets = [16, 0], sizes = [8, 128], strides = [1, 1]} : vector<64x128xf32> to vector<8x128xf32>
    %68 = vector.extract_strided_slice %3 {offsets = [16, 0], sizes = [8, 64], strides = [1, 1]} : vector<64x64xf32> to vector<8x64xf32>
    %69 = vector.extract_strided_slice %4 {offsets = [16, 0], sizes = [8, 32], strides = [1, 1]} : vector<64x32xf32> to vector<8x32xf32>
    %70 = arith.addf %67, %5 : vector<8x128xf32>
    %cst_17 = arith.constant dense<0.000000e+00> : vector<8x128xf32>
    %71 = tpu.matmul %63, %6, %cst_17 {dimension_numbers = #tpu.dot_dimension_numbers<[1], [0], [0], [1], [0, 0, 1, 1], [], []>} : vector<8x64xf32>, vector<64x128xf32>, vector<8x128xf32> -> vector<8x128xf32>
    %72 = arith.addf %70, %71 : vector<8x128xf32>
    %73 = arith.negf %72 : vector<8x128xf32>
    %74 = math.exp %73 : vector<8x128xf32>
    %cst_18 = arith.constant 1.000000e+00 : f32
    %75 = vector.broadcast %cst_18 : f32 to vector<8x128xf32>
    %76 = arith.addf %75, %74 : vector<8x128xf32>
    %77 = arith.divf %75, %76 : vector<8x128xf32>
    %78 = vector.extract_strided_slice %77 {offsets = [0, 0], sizes = [8, 32], strides = [1, 1]} : vector<8x128xf32> to vector<8x32xf32>
    %79 = vector.extract_strided_slice %77 {offsets = [0, 32], sizes = [8, 32], strides = [1, 1]} : vector<8x128xf32> to vector<8x32xf32>
    %80 = vector.extract_strided_slice %77 {offsets = [0, 96], sizes = [8, 32], strides = [1, 1]} : vector<8x128xf32> to vector<8x32xf32>
    %81 = vector.extract_strided_slice %72 {offsets = [0, 64], sizes = [8, 32], strides = [1, 1]} : vector<8x128xf32> to vector<8x32xf32>
    %82 = math.tanh %81 : vector<8x32xf32>
    %83 = arith.mulf %79, %66 : vector<8x32xf32>
    %84 = arith.mulf %78, %82 : vector<8x32xf32>
    %85 = arith.addf %83, %84 : vector<8x32xf32>
    %86 = math.tanh %85 : vector<8x32xf32>
    %87 = arith.mulf %80, %86 : vector<8x32xf32>
    %88 = tpu.concatenate %87, %87 in 1 : vector<8x32xf32>, vector<8x32xf32> -> vector<8x64xf32>
    %89 = arith.mulf %68, %88 : vector<8x64xf32>
    %90 = arith.mulf %68, %63 : vector<8x64xf32>
    %91 = arith.subf %63, %90 : vector<8x64xf32>
    %92 = arith.addf %91, %89 : vector<8x64xf32>
    %93 = arith.subf %85, %66 : vector<8x32xf32>
    %94 = arith.mulf %69, %93 : vector<8x32xf32>
    %95 = arith.addf %66, %94 : vector<8x32xf32>
    %96 = vector.extract_strided_slice %2 {offsets = [24, 0], sizes = [8, 128], strides = [1, 1]} : vector<64x128xf32> to vector<8x128xf32>
    %97 = vector.extract_strided_slice %3 {offsets = [24, 0], sizes = [8, 64], strides = [1, 1]} : vector<64x64xf32> to vector<8x64xf32>
    %98 = vector.extract_strided_slice %4 {offsets = [24, 0], sizes = [8, 32], strides = [1, 1]} : vector<64x32xf32> to vector<8x32xf32>
    %99 = arith.addf %96, %5 : vector<8x128xf32>
    %cst_19 = arith.constant dense<0.000000e+00> : vector<8x128xf32>
    %100 = tpu.matmul %92, %6, %cst_19 {dimension_numbers = #tpu.dot_dimension_numbers<[1], [0], [0], [1], [0, 0, 1, 1], [], []>} : vector<8x64xf32>, vector<64x128xf32>, vector<8x128xf32> -> vector<8x128xf32>
    %101 = arith.addf %99, %100 : vector<8x128xf32>
    %102 = arith.negf %101 : vector<8x128xf32>
    %103 = math.exp %102 : vector<8x128xf32>
    %cst_20 = arith.constant 1.000000e+00 : f32
    %104 = vector.broadcast %cst_20 : f32 to vector<8x128xf32>
    %105 = arith.addf %104, %103 : vector<8x128xf32>
    %106 = arith.divf %104, %105 : vector<8x128xf32>
    %107 = vector.extract_strided_slice %106 {offsets = [0, 0], sizes = [8, 32], strides = [1, 1]} : vector<8x128xf32> to vector<8x32xf32>
    %108 = vector.extract_strided_slice %106 {offsets = [0, 32], sizes = [8, 32], strides = [1, 1]} : vector<8x128xf32> to vector<8x32xf32>
    %109 = vector.extract_strided_slice %106 {offsets = [0, 96], sizes = [8, 32], strides = [1, 1]} : vector<8x128xf32> to vector<8x32xf32>
    %110 = vector.extract_strided_slice %101 {offsets = [0, 64], sizes = [8, 32], strides = [1, 1]} : vector<8x128xf32> to vector<8x32xf32>
    %111 = math.tanh %110 : vector<8x32xf32>
    %112 = arith.mulf %108, %95 : vector<8x32xf32>
    %113 = arith.mulf %107, %111 : vector<8x32xf32>
    %114 = arith.addf %112, %113 : vector<8x32xf32>
    %115 = math.tanh %114 : vector<8x32xf32>
    %116 = arith.mulf %109, %115 : vector<8x32xf32>
    %117 = tpu.concatenate %116, %116 in 1 : vector<8x32xf32>, vector<8x32xf32> -> vector<8x64xf32>
    %118 = arith.mulf %97, %117 : vector<8x64xf32>
    %119 = arith.mulf %97, %92 : vector<8x64xf32>
    %120 = arith.subf %92, %119 : vector<8x64xf32>
    %121 = arith.addf %120, %118 : vector<8x64xf32>
    %122 = arith.subf %114, %95 : vector<8x32xf32>
    %123 = arith.mulf %98, %122 : vector<8x32xf32>
    %124 = arith.addf %95, %123 : vector<8x32xf32>
    %125 = vector.extract_strided_slice %2 {offsets = [32, 0], sizes = [8, 128], strides = [1, 1]} : vector<64x128xf32> to vector<8x128xf32>
    %126 = vector.extract_strided_slice %3 {offsets = [32, 0], sizes = [8, 64], strides = [1, 1]} : vector<64x64xf32> to vector<8x64xf32>
    %127 = vector.extract_strided_slice %4 {offsets = [32, 0], sizes = [8, 32], strides = [1, 1]} : vector<64x32xf32> to vector<8x32xf32>
    %128 = arith.addf %125, %5 : vector<8x128xf32>
    %cst_21 = arith.constant dense<0.000000e+00> : vector<8x128xf32>
    %129 = tpu.matmul %121, %6, %cst_21 {dimension_numbers = #tpu.dot_dimension_numbers<[1], [0], [0], [1], [0, 0, 1, 1], [], []>} : vector<8x64xf32>, vector<64x128xf32>, vector<8x128xf32> -> vector<8x128xf32>
    %130 = arith.addf %128, %129 : vector<8x128xf32>
    %131 = arith.negf %130 : vector<8x128xf32>
    %132 = math.exp %131 : vector<8x128xf32>
    %cst_22 = arith.constant 1.000000e+00 : f32
    %133 = vector.broadcast %cst_22 : f32 to vector<8x128xf32>
    %134 = arith.addf %133, %132 : vector<8x128xf32>
    %135 = arith.divf %133, %134 : vector<8x128xf32>
    %136 = vector.extract_strided_slice %135 {offsets = [0, 0], sizes = [8, 32], strides = [1, 1]} : vector<8x128xf32> to vector<8x32xf32>
    %137 = vector.extract_strided_slice %135 {offsets = [0, 32], sizes = [8, 32], strides = [1, 1]} : vector<8x128xf32> to vector<8x32xf32>
    %138 = vector.extract_strided_slice %135 {offsets = [0, 96], sizes = [8, 32], strides = [1, 1]} : vector<8x128xf32> to vector<8x32xf32>
    %139 = vector.extract_strided_slice %130 {offsets = [0, 64], sizes = [8, 32], strides = [1, 1]} : vector<8x128xf32> to vector<8x32xf32>
    %140 = math.tanh %139 : vector<8x32xf32>
    %141 = arith.mulf %137, %124 : vector<8x32xf32>
    %142 = arith.mulf %136, %140 : vector<8x32xf32>
    %143 = arith.addf %141, %142 : vector<8x32xf32>
    %144 = math.tanh %143 : vector<8x32xf32>
    %145 = arith.mulf %138, %144 : vector<8x32xf32>
    %146 = tpu.concatenate %145, %145 in 1 : vector<8x32xf32>, vector<8x32xf32> -> vector<8x64xf32>
    %147 = arith.mulf %126, %146 : vector<8x64xf32>
    %148 = arith.mulf %126, %121 : vector<8x64xf32>
    %149 = arith.subf %121, %148 : vector<8x64xf32>
    %150 = arith.addf %149, %147 : vector<8x64xf32>
    %151 = arith.subf %143, %124 : vector<8x32xf32>
    %152 = arith.mulf %127, %151 : vector<8x32xf32>
    %153 = arith.addf %124, %152 : vector<8x32xf32>
    %154 = vector.extract_strided_slice %2 {offsets = [40, 0], sizes = [8, 128], strides = [1, 1]} : vector<64x128xf32> to vector<8x128xf32>
    %155 = vector.extract_strided_slice %3 {offsets = [40, 0], sizes = [8, 64], strides = [1, 1]} : vector<64x64xf32> to vector<8x64xf32>
    %156 = vector.extract_strided_slice %4 {offsets = [40, 0], sizes = [8, 32], strides = [1, 1]} : vector<64x32xf32> to vector<8x32xf32>
    %157 = arith.addf %154, %5 : vector<8x128xf32>
    %cst_23 = arith.constant dense<0.000000e+00> : vector<8x128xf32>
    %158 = tpu.matmul %150, %6, %cst_23 {dimension_numbers = #tpu.dot_dimension_numbers<[1], [0], [0], [1], [0, 0, 1, 1], [], []>} : vector<8x64xf32>, vector<64x128xf32>, vector<8x128xf32> -> vector<8x128xf32>
    %159 = arith.addf %157, %158 : vector<8x128xf32>
    %160 = arith.negf %159 : vector<8x128xf32>
    %161 = math.exp %160 : vector<8x128xf32>
    %cst_24 = arith.constant 1.000000e+00 : f32
    %162 = vector.broadcast %cst_24 : f32 to vector<8x128xf32>
    %163 = arith.addf %162, %161 : vector<8x128xf32>
    %164 = arith.divf %162, %163 : vector<8x128xf32>
    %165 = vector.extract_strided_slice %164 {offsets = [0, 0], sizes = [8, 32], strides = [1, 1]} : vector<8x128xf32> to vector<8x32xf32>
    %166 = vector.extract_strided_slice %164 {offsets = [0, 32], sizes = [8, 32], strides = [1, 1]} : vector<8x128xf32> to vector<8x32xf32>
    %167 = vector.extract_strided_slice %164 {offsets = [0, 96], sizes = [8, 32], strides = [1, 1]} : vector<8x128xf32> to vector<8x32xf32>
    %168 = vector.extract_strided_slice %159 {offsets = [0, 64], sizes = [8, 32], strides = [1, 1]} : vector<8x128xf32> to vector<8x32xf32>
    %169 = math.tanh %168 : vector<8x32xf32>
    %170 = arith.mulf %166, %153 : vector<8x32xf32>
    %171 = arith.mulf %165, %169 : vector<8x32xf32>
    %172 = arith.addf %170, %171 : vector<8x32xf32>
    %173 = math.tanh %172 : vector<8x32xf32>
    %174 = arith.mulf %167, %173 : vector<8x32xf32>
    %175 = tpu.concatenate %174, %174 in 1 : vector<8x32xf32>, vector<8x32xf32> -> vector<8x64xf32>
    %176 = arith.mulf %155, %175 : vector<8x64xf32>
    %177 = arith.mulf %155, %150 : vector<8x64xf32>
    %178 = arith.subf %150, %177 : vector<8x64xf32>
    %179 = arith.addf %178, %176 : vector<8x64xf32>
    %180 = arith.subf %172, %153 : vector<8x32xf32>
    %181 = arith.mulf %156, %180 : vector<8x32xf32>
    %182 = arith.addf %153, %181 : vector<8x32xf32>
    %183 = vector.extract_strided_slice %2 {offsets = [48, 0], sizes = [8, 128], strides = [1, 1]} : vector<64x128xf32> to vector<8x128xf32>
    %184 = vector.extract_strided_slice %3 {offsets = [48, 0], sizes = [8, 64], strides = [1, 1]} : vector<64x64xf32> to vector<8x64xf32>
    %185 = vector.extract_strided_slice %4 {offsets = [48, 0], sizes = [8, 32], strides = [1, 1]} : vector<64x32xf32> to vector<8x32xf32>
    %186 = arith.addf %183, %5 : vector<8x128xf32>
    %cst_25 = arith.constant dense<0.000000e+00> : vector<8x128xf32>
    %187 = tpu.matmul %179, %6, %cst_25 {dimension_numbers = #tpu.dot_dimension_numbers<[1], [0], [0], [1], [0, 0, 1, 1], [], []>} : vector<8x64xf32>, vector<64x128xf32>, vector<8x128xf32> -> vector<8x128xf32>
    %188 = arith.addf %186, %187 : vector<8x128xf32>
    %189 = arith.negf %188 : vector<8x128xf32>
    %190 = math.exp %189 : vector<8x128xf32>
    %cst_26 = arith.constant 1.000000e+00 : f32
    %191 = vector.broadcast %cst_26 : f32 to vector<8x128xf32>
    %192 = arith.addf %191, %190 : vector<8x128xf32>
    %193 = arith.divf %191, %192 : vector<8x128xf32>
    %194 = vector.extract_strided_slice %193 {offsets = [0, 0], sizes = [8, 32], strides = [1, 1]} : vector<8x128xf32> to vector<8x32xf32>
    %195 = vector.extract_strided_slice %193 {offsets = [0, 32], sizes = [8, 32], strides = [1, 1]} : vector<8x128xf32> to vector<8x32xf32>
    %196 = vector.extract_strided_slice %193 {offsets = [0, 96], sizes = [8, 32], strides = [1, 1]} : vector<8x128xf32> to vector<8x32xf32>
    %197 = vector.extract_strided_slice %188 {offsets = [0, 64], sizes = [8, 32], strides = [1, 1]} : vector<8x128xf32> to vector<8x32xf32>
    %198 = math.tanh %197 : vector<8x32xf32>
    %199 = arith.mulf %195, %182 : vector<8x32xf32>
    %200 = arith.mulf %194, %198 : vector<8x32xf32>
    %201 = arith.addf %199, %200 : vector<8x32xf32>
    %202 = math.tanh %201 : vector<8x32xf32>
    %203 = arith.mulf %196, %202 : vector<8x32xf32>
    %204 = tpu.concatenate %203, %203 in 1 : vector<8x32xf32>, vector<8x32xf32> -> vector<8x64xf32>
    %205 = arith.mulf %184, %204 : vector<8x64xf32>
    %206 = arith.mulf %184, %179 : vector<8x64xf32>
    %207 = arith.subf %179, %206 : vector<8x64xf32>
    %208 = arith.addf %207, %205 : vector<8x64xf32>
    %209 = arith.subf %201, %182 : vector<8x32xf32>
    %210 = arith.mulf %185, %209 : vector<8x32xf32>
    %211 = arith.addf %182, %210 : vector<8x32xf32>
    %212 = vector.extract_strided_slice %2 {offsets = [56, 0], sizes = [8, 128], strides = [1, 1]} : vector<64x128xf32> to vector<8x128xf32>
    %213 = vector.extract_strided_slice %3 {offsets = [56, 0], sizes = [8, 64], strides = [1, 1]} : vector<64x64xf32> to vector<8x64xf32>
    %214 = arith.addf %212, %5 : vector<8x128xf32>
    %cst_27 = arith.constant dense<0.000000e+00> : vector<8x128xf32>
    %215 = tpu.matmul %208, %6, %cst_27 {dimension_numbers = #tpu.dot_dimension_numbers<[1], [0], [0], [1], [0, 0, 1, 1], [], []>} : vector<8x64xf32>, vector<64x128xf32>, vector<8x128xf32> -> vector<8x128xf32>
    %216 = arith.addf %214, %215 : vector<8x128xf32>
    %217 = arith.negf %216 : vector<8x128xf32>
    %218 = math.exp %217 : vector<8x128xf32>
    %cst_28 = arith.constant 1.000000e+00 : f32
    %219 = vector.broadcast %cst_28 : f32 to vector<8x128xf32>
    %220 = arith.addf %219, %218 : vector<8x128xf32>
    %221 = arith.divf %219, %220 : vector<8x128xf32>
    %222 = vector.extract_strided_slice %221 {offsets = [0, 0], sizes = [8, 32], strides = [1, 1]} : vector<8x128xf32> to vector<8x32xf32>
    %223 = vector.extract_strided_slice %221 {offsets = [0, 32], sizes = [8, 32], strides = [1, 1]} : vector<8x128xf32> to vector<8x32xf32>
    %224 = vector.extract_strided_slice %221 {offsets = [0, 96], sizes = [8, 32], strides = [1, 1]} : vector<8x128xf32> to vector<8x32xf32>
    %225 = vector.extract_strided_slice %216 {offsets = [0, 64], sizes = [8, 32], strides = [1, 1]} : vector<8x128xf32> to vector<8x32xf32>
    %226 = math.tanh %225 : vector<8x32xf32>
    %227 = arith.mulf %223, %211 : vector<8x32xf32>
    %228 = arith.mulf %222, %226 : vector<8x32xf32>
    %229 = arith.addf %227, %228 : vector<8x32xf32>
    %230 = math.tanh %229 : vector<8x32xf32>
    %231 = arith.mulf %224, %230 : vector<8x32xf32>
    %232 = tpu.concatenate %231, %231 in 1 : vector<8x32xf32>, vector<8x32xf32> -> vector<8x64xf32>
    %233 = arith.mulf %213, %232 : vector<8x64xf32>
    %234 = tpu.concatenate %31, %60, %89, %118, %147, %176, %205, %233 in 0 : vector<8x64xf32>, vector<8x64xf32>, vector<8x64xf32>, vector<8x64xf32>, vector<8x64xf32>, vector<8x64xf32>, vector<8x64xf32>, vector<8x64xf32> -> vector<64x64xf32>
    %c0_29 = arith.constant 0 : index
    %c0_30 = arith.constant 0 : index
    %235 = vector.load %arg7[%c0_29, %c0_30] : memref<16x64xf32, #tpu.memory_space<vmem>>, vector<16x64xf32>
    %cst_31 = arith.constant dense<0.000000e+00> : vector<16x64xf32>
    %236 = tpu.matmul %235, %234, %cst_31 {dimension_numbers = #tpu.dot_dimension_numbers<[1], [0], [0], [1], [0, 0, 1, 1], [], []>} : vector<16x64xf32>, vector<64x64xf32>, vector<16x64xf32> -> vector<16x64xf32>
    %c0_32 = arith.constant 0 : index
    %c0_33 = arith.constant 0 : index
    %237 = vector.load %arg6[%c0_32, %c0_33] : memref<64x128xf32, #tpu.memory_space<vmem>>, vector<64x128xf32>
    %cst_34 = arith.constant dense<0.000000e+00> : vector<16x128xf32>
    %238 = tpu.matmul %236, %237, %cst_34 {dimension_numbers = #tpu.dot_dimension_numbers<[1], [0], [0], [1], [0, 0, 1, 1], [], []>} : vector<16x64xf32>, vector<64x128xf32>, vector<16x128xf32> -> vector<16x128xf32>
    %c0_35 = arith.constant 0 : index
    %c0_36 = arith.constant 0 : index
    %239 = vector.load %arg8[%c0_35, %c0_36] : memref<1x128xf32, #tpu.memory_space<vmem>>, vector<1x128xf32>
    %240 = vector.broadcast %239 : vector<1x128xf32> to vector<16x128xf32>
    %241 = arith.addf %238, %240 : vector<16x128xf32>
    %c0_37 = arith.constant 0 : index
    %c0_38 = arith.constant 0 : index
    %242 = vector.load %arg9[%c0_37, %c0_38] : memref<16x128xf32, #tpu.memory_space<vmem>>, vector<16x128xf32>
    tpu.vector_store %arg9[%c0_37, %c0_38], %241 {strides = array<i32>} : memref<16x128xf32, #tpu.memory_space<vmem>>, vector<16x128xf32>,
    return
  }
}

</mosaic_0001>

<llo_original>
// kernel: tpu_custom_call.1
$region0: #{tpu_custom_call.1}
  #allocation0 [shape = 'u32[]', space=smem, size = 0x4, offset = 0x4, fixed_abs, tag = 'smem constant byte address 0x4 - core index']
  #allocation1 [shape = 'u32[72,128]{1,0:T(1,128)}', space=vmem, size = 0x9000, scoped, tag = 'internal scratch']
  %s0 = inlined_call_operand.vmem [shape: f32[64,48], index: 0, kind: input, shape index: {}]
  %s1 = inlined_call_operand.vmem [shape: f32[64,64], index: 1, kind: input, shape index: {}]
  %s2 = inlined_call_operand.vmem [shape: f32[64,32], index: 2, kind: input, shape index: {}]
  %s3 = inlined_call_operand.hbm [shape: f32[8,128], index: 3, kind: input, shape index: {}]
  %s4 = inlined_call_operand.vmem [shape: f32[48,128], index: 4, kind: input, shape index: {}]
  %s5 = inlined_call_operand.vmem [shape: f32[64,128], index: 5, kind: input, shape index: {}]
  %s6 = inlined_call_operand.hbm [shape: f32[64,128], index: 6, kind: input, shape index: {}]
  %s7 = inlined_call_operand.hbm [shape: f32[16,64], index: 7, kind: input, shape index: {}]
  %s8 = inlined_call_operand.vmem [shape: f32[1,128], index: 8, kind: input, shape index: {}]
  %s9 = inlined_call_operand.hbm [shape: f32[16,128], index: 9, kind: output, shape index: {}]
  %s10 = sld [smem:[#allocation0]]
  $region58: #{tpu_custom_call.1} parent=0
    _
  %s12 = ssub.s32 1, %s10
  %s13 = scalar_select 0, %s12, %s10
  $region1: #{tpu_custom_call.1} parent=0
    #allocation2 [shape = 'u8[4096]{0}', space=vmem, size = 0x1000, scoped, tag = 'input window, operand 3, single buffered']
    #allocation3 [shape = 's32[1]{0}', space=sflag, size = 0x4, scoped, tag = 'scoped memory for tpu_custom_call.1']
    #allocation4 [shape = 's32[1]{0}', space=sflag, size = 0x4, scoped, tag = 'scoped memory for tpu_custom_call.1']
    #allocation5 [shape = 'u8[32768]{0}', space=vmem, size = 0x8000, scoped, tag = 'input window, operand 6, single buffered']
    #allocation6 [shape = 's32[1]{0}', space=sflag, size = 0x4, scoped, tag = 'scoped memory for tpu_custom_call.1']
    #allocation7 [shape = 'u8[8192]{0}', space=vmem, size = 0x2000, scoped, tag = 'input window, operand 7, single buffered']
    #allocation8 [shape = 'u8[8192]{0}', space=vmem, size = 0x2000, scoped, tag = 'output window, operand 0, single buffered']
    %14 = vsyncpa [#allocation3], 0
    %15 = vsyncpa [#allocation6], 0
    %16 = vsyncpa [#allocation4], 0
    // Predicated region
    $region2: #{tpu_custom_call.1} parent=1 // pred_check
      _
    $region3: #{tpu_custom_call.1} parent=1 // pred_check_branch
      %18 = sbr.rel (0) target = $region5
    $region4: #{tpu_custom_call.1} parent=1 // pred_region
      _
    $region5: #{tpu_custom_call.1} parent=1 // pred_fallthru
      _
    // Predicated region
    $region6: #{tpu_custom_call.1} parent=1 // pred_check
      _
    $region7: #{tpu_custom_call.1} parent=1 // pred_check_branch
      %20 = sbr.rel (0) target = $region9
    $region8: #{tpu_custom_call.1} parent=1 // pred_region
      _
    $region9: #{tpu_custom_call.1} parent=1 // pred_fallthru
      _
    // Predicated region
    $region10: #{tpu_custom_call.1} parent=1 // pred_check
      _
    $region11: #{tpu_custom_call.1} parent=1 // pred_check_branch
      %22 = sbr.rel (0) target = $region13
    $region12: #{tpu_custom_call.1} parent=1 // pred_region
      _
    $region13: #{tpu_custom_call.1} parent=1 // pred_fallthru
      _
    // Predicated region
    $region14: #{tpu_custom_call.1} parent=1 // pred_check
      _
    $region15: #{tpu_custom_call.1} parent=1 // pred_check_branch
      %24 = sbr.rel (0) target = $region17
    $region16: #{tpu_custom_call.1} parent=1 // pred_region
      %26 = vsyncadd [#allocation3], 0
      %s28 = sshll.u32 %s3, 4
      %s29 = int_to_ptr.hbm [resolvable:$true] %s28
      %s30 = sshll.u32 [#allocation2], 4
      %s31 = int_to_ptr.vmem [resolvable:$true] %s30
      %33 = dma.hbm_to_vmem [thread:$0]  %s29, 128, %s31, [#allocation3]
    $region17: #{tpu_custom_call.1} parent=1 // pred_fallthru
      _
    // Predicated region
    $region18: #{tpu_custom_call.1} parent=1 // pred_check
      _
    $region19: #{tpu_custom_call.1} parent=1 // pred_check_branch
      %35 = sbr.rel (0) target = $region21
    $region20: #{tpu_custom_call.1} parent=1 // pred_region
      _
    $region21: #{tpu_custom_call.1} parent=1 // pred_fallthru
      _
    // Predicated region
    $region22: #{tpu_custom_call.1} parent=1 // pred_check
      _
    $region23: #{tpu_custom_call.1} parent=1 // pred_check_branch
      %37 = sbr.rel (0) target = $region25
    $region24: #{tpu_custom_call.1} parent=1 // pred_region
      _
    $region25: #{tpu_custom_call.1} parent=1 // pred_fallthru
      _
    // Predicated region
    $region26: #{tpu_custom_call.1} parent=1 // pred_check
      _
    $region27: #{tpu_custom_call.1} parent=1 // pred_check_branch
      %39 = sbr.rel (0) target = $region29
    $region28: #{tpu_custom_call.1} parent=1 // pred_region
      %41 = vsyncadd [#allocation6], 0
      %s42 = sshll.u32 %s6, 4
      %s43 = int_to_ptr.hbm [resolvable:$true] %s42
      %s44 = sshll.u32 [#allocation5], 4
      %s45 = int_to_ptr.vmem [resolvable:$true] %s44
      %50 = dma.hbm_to_vmem [thread:$0]  %s43, 1024, %s45, [#allocation6], 128, 128, 8
    $region29: #{tpu_custom_call.1} parent=1 // pred_fallthru
      _
    // Predicated region
    $region30: #{tpu_custom_call.1} parent=1 // pred_check
      _
    $region31: #{tpu_custom_call.1} parent=1 // pred_check_branch
      %52 = sbr.rel (0) target = $region33
    $region32: #{tpu_custom_call.1} parent=1 // pred_region
      %54 = vsyncadd [#allocation6], 0
      %s55 = sshll.u32 %s7, 4
      %s56 = int_to_ptr.hbm [resolvable:$true] %s55
      %s57 = sshll.u32 [#allocation7], 4
      %s58 = int_to_ptr.vmem [resolvable:$true] %s57
      %63 = dma.hbm_to_vmem [thread:$0]  %s56, 256, %s58, [#allocation6], 128, 128, 8
    $region33: #{tpu_custom_call.1} parent=1 // pred_fallthru
      _
    // Predicated region
    $region34: #{tpu_custom_call.1} parent=1 // pred_check
      _
    $region35: #{tpu_custom_call.1} parent=1 // pred_check_branch
      %65 = sbr.rel (0) target = $region37
    $region36: #{tpu_custom_call.1} parent=1 // pred_region
      _
    $region37: #{tpu_custom_call.1} parent=1 // pred_fallthru
      _
    // Predicated region
    $region38: #{tpu_custom_call.1} parent=1 // pred_check
      _
    $region39: #{tpu_custom_call.1} parent=1 // pred_check_branch
      %67 = sbr.rel (0) target = $region41
    $region40: #{tpu_custom_call.1} parent=1 // pred_region
      %69 = dma.done [#allocation3], 128
    $region41: #{tpu_custom_call.1} parent=1 // pred_fallthru
      _
    // Predicated region
    $region42: #{tpu_custom_call.1} parent=1 // pred_check
      _
    $region43: #{tpu_custom_call.1} parent=1 // pred_check_branch
      %71 = sbr.rel (0) target = $region45
    $region44: #{tpu_custom_call.1} parent=1 // pred_region
      %73 = dma.done [#allocation6], 1024
    $region45: #{tpu_custom_call.1} parent=1 // pred_fallthru
      _
    // Predicated region
    $region46: #{tpu_custom_call.1} parent=1 // pred_check
      _
    $region47: #{tpu_custom_call.1} parent=1 // pred_check_branch
      %75 = sbr.rel (0) target = $region49
    $region48: #{tpu_custom_call.1} parent=1 // pred_region
      %77 = dma.done [#allocation6], 256
    $region49: #{tpu_custom_call.1} parent=1 // pred_fallthru
      _
    %v78 = vld [vmem:[%s0] sm:$0xff]
    %v79 = vld [vmem:[%s0 + $0x8] sm:$0xff]
    %v80 = vld [vmem:[%s0 + $0x10] sm:$0xff]
    %v81 = vld [vmem:[%s0 + $0x18] sm:$0xff]
    %v82 = vld [vmem:[%s0 + $0x20] sm:$0xff]
    %v83 = vld [vmem:[%s0 + $0x28] sm:$0xff]
    %v84 = vld [vmem:[%s0 + $0x30] sm:$0xff]
    %v85 = vld [vmem:[%s0 + $0x38] sm:$0xff]
    %v86 = vld [vmem:[%s4] sm:$0xff]
    %v87 = vld [vmem:[%s4 + $0x8] sm:$0xff]
    %v88 = vld [vmem:[%s4 + $0x10] sm:$0xff]
    %v89 = vld [vmem:[%s4 + $0x18] sm:$0xff]
    %v90 = vld [vmem:[%s4 + $0x20] sm:$0xff]
    %v91 = vld [vmem:[%s4 + $0x28] sm:$0xff]
    %vm92 = vcmask 392192
    %v94 = vsel %vm92, %v78, 0
    %v97 = vsel %vm92, %v79, 0
    %v100 = vsel %vm92, %v80, 0
    %v103 = vsel %vm92, %v81, 0
    %v106 = vsel %vm92, %v82, 0
    %v109 = vsel %vm92, %v83, 0
    %v112 = vsel %vm92, %v84, 0
    %v115 = vsel %vm92, %v85, 0
    %117 = vmatpush.msra.mxu0 0.0
    %118 = vmatpush.msra.mxu0 0.0
    %119 = vmatpush.msra.mxu0 0.0
    %120 = vmatpush.msra.mxu0 0.0
    %121 = vmatpush.msra.mxu0 0.0
    %122 = vmatpush.msra.mxu0 0.0
    %123 = vmatpush.msra.mxu0 0.0
    %124 = vmatpush.msra.mxu0 0.0
    %125 = vmatpush.msra.mxu0 0.0
    %126 = vmatpush.msra.mxu0 0.0
    %127 = vmatpush.msra.mxu0 %v91
    %128 = vmatpush.msra.mxu0 %v90
    %129 = vmatpush.msra.mxu0 %v89
    %130 = vmatpush.msra.mxu0 %v88
    %131 = vmatpush.msra.mxu0 %v87
    %132 = vmatpush.msra.mxu0 %v86
    %133 = vmatmul.f32.gmra.mxu0 %v94
    %v134 = vpop.f32.mrf.mxu0
    %v135 = vadd.f32 0.0, %v134
    %136 = vmatmul.f32.gmra.mxu0 %v97
    %v137 = vpop.f32.mrf.mxu0
    %v138 = vadd.f32 0.0, %v137
    %139 = vmatmul.f32.gmra.mxu0 %v100
    %v140 = vpop.f32.mrf.mxu0
    %v141 = vadd.f32 0.0, %v140
    %142 = vmatmul.f32.gmra.mxu0 %v103
    %v143 = vpop.f32.mrf.mxu0
    %v144 = vadd.f32 0.0, %v143
    %145 = vmatmul.f32.gmra.mxu0 %v106
    %v146 = vpop.f32.mrf.mxu0
    %v147 = vadd.f32 0.0, %v146
    %148 = vmatmul.f32.gmra.mxu0 %v109
    %v149 = vpop.f32.mrf.mxu0
    %v150 = vadd.f32 0.0, %v149
    %151 = vmatmul.f32.gmra.mxu0 %v112
    %v152 = vpop.f32.mrf.mxu0
    %v153 = vadd.f32 0.0, %v152
    %154 = vmatmul.f32.gmra.mxu0 %v115
    %v155 = vpop.f32.mrf.mxu0
    %v156 = vadd.f32 0.0, %v155
    %157 = vdwg.mxu0
    %v158 = vld [vmem:[%s1] sm:$0xff]
    %v159 = vld [vmem:[%s1 + $0x8] sm:$0xff]
    %v160 = vld [vmem:[%s1 + $0x10] sm:$0xff]
    %v161 = vld [vmem:[%s1 + $0x18] sm:$0xff]
    %v162 = vld [vmem:[%s1 + $0x20] sm:$0xff]
    %v163 = vld [vmem:[%s1 + $0x28] sm:$0xff]
    %v164 = vld [vmem:[%s1 + $0x30] sm:$0xff]
    %v165 = vld [vmem:[%s1 + $0x38] sm:$0xff]
    %v166 = vld [vmem:[%s2] sm:$0xff]
    %v167 = vld [vmem:[%s2 + $0x8] sm:$0xff]
    %v168 = vld [vmem:[%s2 + $0x10] sm:$0xff]
    %v169 = vld [vmem:[%s2 + $0x18] sm:$0xff]
    %v170 = vld [vmem:[%s2 + $0x20] sm:$0xff]
    %v171 = vld [vmem:[%s2 + $0x28] sm:$0xff]
    %v172 = vld [vmem:[%s2 + $0x30] sm:$0xff]
    %v173 = vld [vmem:[#allocation2] sm:$0xff]
    %v174 = vld [vmem:[%s5] sm:$0xff]
    %v175 = vld [vmem:[%s5 + $0x8] sm:$0xff]
    %v176 = vld [vmem:[%s5 + $0x10] sm:$0xff]
    %v177 = vld [vmem:[%s5 + $0x18] sm:$0xff]
    %v178 = vld [vmem:[%s5 + $0x20] sm:$0xff]
    %v179 = vld [vmem:[%s5 + $0x28] sm:$0xff]
    %v180 = vld [vmem:[%s5 + $0x30] sm:$0xff]
    %v181 = vld [vmem:[%s5 + $0x38] sm:$0xff]
    %v182 = vadd.f32 %v135, %v173
    %vm183 = vcmask 523264
    %v185 = vsel %vm183, 0.0, 0
    %187 = vmatpush.msra.mxu0 0.0
    %188 = vmatpush.msra.mxu0 0.0
    %189 = vmatpush.msra.mxu0 0.0
    %190 = vmatpush.msra.mxu0 0.0
    %191 = vmatpush.msra.mxu0 0.0
    %192 = vmatpush.msra.mxu0 0.0
    %193 = vmatpush.msra.mxu0 0.0
    %194 = vmatpush.msra.mxu0 0.0
    %195 = vmatpush.msra.mxu0 %v181
    %196 = vmatpush.msra.mxu0 %v180
    %197 = vmatpush.msra.mxu0 %v179
    %198 = vmatpush.msra.mxu0 %v178
    %199 = vmatpush.msra.mxu0 %v177
    %200 = vmatpush.msra.mxu0 %v176
    %201 = vmatpush.msra.mxu0 %v175
    %202 = vmatpush.msra.mxu0 %v174
    %203 = vmatmul.f32.gmra.mxu0 %v185
    %v204 = vpop.f32.mrf.mxu0
    %v205 = vadd.f32 0.0, %v204
    %206 = vdwg.mxu0
    %v207 = vadd.f32 %v182, %v205
    %v208 = vxor.u32 %v207, 2147483648
    %v209 = vmul.f32 %v208, 1.442695
    %v210 = vpow.pop %v209
    %v211 = vadd.f32 %v210, 1.0
    %v212 = vrcp.pop %v211
    %v213 = vmul.f32 %v211, %v212
    %v214 = vsub.f32 1.0, %v213
    %v215 = vmul.f32 %v212, %v214
    %v216 = vadd.f32 %v212, %v215
    %vm217 = vweird.f32 %v211
    %vm218 = vweird.f32 %v212
    %vm219 = vmor %vm217, %vm218
    %v220 = vsel %vm219, %v212, %v216
    %v221 = vand.u32 2147483647, %v211
    %vm222 = vcmp.eq.f32.partialorder %v221, 8.507059e+37
    %v223 = vand.u32 %v211, 2147483648
    %v224 = vor.u32 1.1754944e-38, %v223
    %v225 = vsel %vm222, %v224, %v220
    %v226 = vmul.f32 1.0, %v225
    %v227 = vtanh.pop %v207
    %v228 = vmul.f32 %v226, 0.0
    %230 = vrot.lane.b32.xlu0 %v227, 64
    %v231 = vpop.permute.xlu0 %230
    %v233 = vmul.f32 %v226, %v231
    %235 = vrot.lane.b32.xlu0 %v233, 32
    %v236 = vpop.permute.xlu0 %235
    %v238 = vadd.f32 %v228, %v236
    %v239 = vtanh.pop %v238
    %241 = vrot.lane.b32.xlu0 %v239, 64
    %v242 = vpop.permute.xlu0 %241
    %v244 = vmul.f32 %v226, %v242
    %246 = vrot.lane.b32.xlu0 %v244, 32
    %v247 = vpop.permute.xlu0 %246
    %249 = vrot.lane.b32.xlu0 %v244, 64
    %v250 = vpop.permute.xlu0 %249
    %vm252 = vcmask 261120
    %v253 = vsel %vm252, %v247, %v250
    %v254 = vmul.f32 %v158, %v253
    %v255 = vmul.f32 %v158, 0.0
    %v256 = vsub.f32 0.0, %v255
    %v257 = vadd.f32 %v256, %v254
    %259 = vrot.lane.b32.xlu0 %v238, 96
    %v260 = vpop.permute.xlu0 %259
    %v262 = vmul.f32 %v166, %v260
    %v263 = vadd.f32 %v262, 0.0
    %v264 = vadd.f32 %v138, %v173
    %v266 = vsel %vm183, %v257, 0
    %268 = vmatpush.msra.mxu0 0.0
    %269 = vmatpush.msra.mxu0 0.0
    %270 = vmatpush.msra.mxu0 0.0
    %271 = vmatpush.msra.mxu0 0.0
    %272 = vmatpush.msra.mxu0 0.0
    %273 = vmatpush.msra.mxu0 0.0
    %274 = vmatpush.msra.mxu0 0.0
    %275 = vmatpush.msra.mxu0 0.0
    %276 = vmatpush.msra.mxu0 %v181
    %277 = vmatpush.msra.mxu0 %v180
    %278 = vmatpush.msra.mxu0 %v179
    %279 = vmatpush.msra.mxu0 %v178
    %280 = vmatpush.msra.mxu0 %v177
    %281 = vmatpush.msra.mxu0 %v176
    %282 = vmatpush.msra.mxu0 %v175
    %283 = vmatpush.msra.mxu0 %v174
    %284 = vmatmul.f32.gmra.mxu0 %v266
    %v285 = vpop.f32.mrf.mxu0
    %v286 = vadd.f32 0.0, %v285
    %287 = vdwg.mxu0
    %v288 = vadd.f32 %v264, %v286
    %v289 = vxor.u32 %v288, 2147483648
    %v290 = vmul.f32 %v289, 1.442695
    %v291 = vpow.pop %v290
    %v292 = vadd.f32 %v291, 1.0
    %v293 = vrcp.pop %v292
    %v294 = vmul.f32 %v292, %v293
    %v295 = vsub.f32 1.0, %v294
    %v296 = vmul.f32 %v293, %v295
    %v297 = vadd.f32 %v293, %v296
    %vm298 = vweird.f32 %v292
    %vm299 = vweird.f32 %v293
    %vm300 = vmor %vm298, %vm299
    %v301 = vsel %vm300, %v293, %v297
    %v302 = vand.u32 2147483647, %v292
    %vm303 = vcmp.eq.f32.partialorder %v302, 8.507059e+37
    %v304 = vand.u32 %v292, 2147483648
    %v305 = vor.u32 1.1754944e-38, %v304
    %v306 = vsel %vm303, %v305, %v301
    %v307 = vmul.f32 1.0, %v306
    %v308 = vtanh.pop %v288
    %310 = vrot.lane.b32.xlu0 %v263, 32
    %v311 = vpop.permute.xlu0 %310
    %v313 = vmul.f32 %v307, %v311
    %315 = vrot.lane.b32.xlu0 %v308, 64
    %v316 = vpop.permute.xlu0 %315
    %v318 = vmul.f32 %v307, %v316
    %320 = vrot.lane.b32.xlu0 %v318, 32
    %v321 = vpop.permute.xlu0 %320
    %v323 = vadd.f32 %v313, %v321
    %v324 = vtanh.pop %v323
    %326 = vrot.lane.b32.xlu0 %v324, 64
    %v327 = vpop.permute.xlu0 %326
    %v329 = vmul.f32 %v307, %v327
    %331 = vrot.lane.b32.xlu0 %v329, 32
    %v332 = vpop.permute.xlu0 %331
    %334 = vrot.lane.b32.xlu0 %v329, 64
    %v335 = vpop.permute.xlu0 %334
    %v337 = vsel %vm252, %v332, %v335
    %v338 = vmul.f32 %v159, %v337
    %v339 = vmul.f32 %v159, %v257
    %v340 = vsub.f32 %v257, %v339
    %v341 = vadd.f32 %v340, %v338
    %v342 = vsub.f32 %v323, %v311
    %344 = vrot.lane.b32.xlu0 %v342, 96
    %v345 = vpop.permute.xlu0 %344
    %v347 = vmul.f32 %v167, %v345
    %v348 = vadd.f32 %v263, %v347
    %v349 = vadd.f32 %v141, %v173
    %v351 = vsel %vm183, %v341, 0
    %353 = vmatpush.msra.mxu0 0.0
    %354 = vmatpush.msra.mxu0 0.0
    %355 = vmatpush.msra.mxu0 0.0
    %356 = vmatpush.msra.mxu0 0.0
    %357 = vmatpush.msra.mxu0 0.0
    %358 = vmatpush.msra.mxu0 0.0
    %359 = vmatpush.msra.mxu0 0.0
    %360 = vmatpush.msra.mxu0 0.0
    %361 = vmatpush.msra.mxu0 %v181
    %362 = vmatpush.msra.mxu0 %v180
    %363 = vmatpush.msra.mxu0 %v179
    %364 = vmatpush.msra.mxu0 %v178
    %365 = vmatpush.msra.mxu0 %v177
    %366 = vmatpush.msra.mxu0 %v176
    %367 = vmatpush.msra.mxu0 %v175
    %368 = vmatpush.msra.mxu0 %v174
    %369 = vmatmul.f32.gmra.mxu0 %v351
    %v370 = vpop.f32.mrf.mxu0
    %v371 = vadd.f32 0.0, %v370
    %372 = vdwg.mxu0
    %v373 = vadd.f32 %v349, %v371
    %v374 = vxor.u32 %v373, 2147483648
    %v375 = vmul.f32 %v374, 1.442695
    %v376 = vpow.pop %v375
    %v377 = vadd.f32 %v376, 1.0
    %v378 = vrcp.pop %v377
    %v379 = vmul.f32 %v377, %v378
    %v380 = vsub.f32 1.0, %v379
    %v381 = vmul.f32 %v378, %v380
    %v382 = vadd.f32 %v378, %v381
    %vm383 = vweird.f32 %v377
    %vm384 = vweird.f32 %v378
    %vm385 = vmor %vm383, %vm384
    %v386 = vsel %vm385, %v378, %v382
    %v387 = vand.u32 2147483647, %v377
    %vm388 = vcmp.eq.f32.partialorder %v387, 8.507059e+37
    %v389 = vand.u32 %v377, 2147483648
    %v390 = vor.u32 1.1754944e-38, %v389
    %v391 = vsel %vm388, %v390, %v386
    %v392 = vmul.f32 1.0, %v391
    %v393 = vtanh.pop %v373
    %395 = vrot.lane.b32.xlu0 %v348, 32
    %v396 = vpop.permute.xlu0 %395
    %v398 = vmul.f32 %v392, %v396
    %400 = vrot.lane.b32.xlu0 %v393, 64
    %v401 = vpop.permute.xlu0 %400
    %v403 = vmul.f32 %v392, %v401
    %405 = vrot.lane.b32.xlu0 %v403, 32
    %v406 = vpop.permute.xlu0 %405
    %v408 = vadd.f32 %v398, %v406
    %v409 = vtanh.pop %v408
    %411 = vrot.lane.b32.xlu0 %v409, 64
    %v412 = vpop.permute.xlu0 %411
    %v414 = vmul.f32 %v392, %v412
    %416 = vrot.lane.b32.xlu0 %v414, 32
    %v417 = vpop.permute.xlu0 %416
    %419 = vrot.lane.b32.xlu0 %v414, 64
    %v420 = vpop.permute.xlu0 %419
    %v422 = vsel %vm252, %v417, %v420
    %v423 = vmul.f32 %v160, %v422
    %v424 = vmul.f32 %v160, %v341
    %v425 = vsub.f32 %v341, %v424
    %v426 = vadd.f32 %v425, %v423
    %v427 = vsub.f32 %v408, %v396
    %429 = vrot.lane.b32.xlu0 %v427, 96
    %v430 = vpop.permute.xlu0 %429
    %v432 = vmul.f32 %v168, %v430
    %v433 = vadd.f32 %v348, %v432
    %v434 = vadd.f32 %v144, %v173
    %v436 = vsel %vm183, %v426, 0
    %438 = vmatpush.msra.mxu0 0.0
    %439 = vmatpush.msra.mxu0 0.0
    %440 = vmatpush.msra.mxu0 0.0
    %441 = vmatpush.msra.mxu0 0.0
    %442 = vmatpush.msra.mxu0 0.0
    %443 = vmatpush.msra.mxu0 0.0
    %444 = vmatpush.msra.mxu0 0.0
    %445 = vmatpush.msra.mxu0 0.0
    %446 = vmatpush.msra.mxu0 %v181
    %447 = vmatpush.msra.mxu0 %v180
    %448 = vmatpush.msra.mxu0 %v179
    %449 = vmatpush.msra.mxu0 %v178
    %450 = vmatpush.msra.mxu0 %v177
    %451 = vmatpush.msra.mxu0 %v176
    %452 = vmatpush.msra.mxu0 %v175
    %453 = vmatpush.msra.mxu0 %v174
    %454 = vmatmul.f32.gmra.mxu0 %v436
    %v455 = vpop.f32.mrf.mxu0
    %v456 = vadd.f32 0.0, %v455
    %457 = vdwg.mxu0
    %v458 = vadd.f32 %v434, %v456
    %v459 = vxor.u32 %v458, 2147483648
    %v460 = vmul.f32 %v459, 1.442695
    %v461 = vpow.pop %v460
    %v462 = vadd.f32 %v461, 1.0
    %v463 = vrcp.pop %v462
    %v464 = vmul.f32 %v462, %v463
    %v465 = vsub.f32 1.0, %v464
    %v466 = vmul.f32 %v463, %v465
    %v467 = vadd.f32 %v463, %v466
    %vm468 = vweird.f32 %v462
    %vm469 = vweird.f32 %v463
    %vm470 = vmor %vm468, %vm469
    %v471 = vsel %vm470, %v463, %v467
    %v472 = vand.u32 2147483647, %v462
    %vm473 = vcmp.eq.f32.partialorder %v472, 8.507059e+37
    %v474 = vand.u32 %v462, 2147483648
    %v475 = vor.u32 1.1754944e-38, %v474
    %v476 = vsel %vm473, %v475, %v471
    %v477 = vmul.f32 1.0, %v476
    %v478 = vtanh.pop %v458
    %480 = vrot.lane.b32.xlu0 %v433, 32
    %v481 = vpop.permute.xlu0 %480
    %v483 = vmul.f32 %v477, %v481
    %485 = vrot.lane.b32.xlu0 %v478, 64
    %v486 = vpop.permute.xlu0 %485
    %v488 = vmul.f32 %v477, %v486
    %490 = vrot.lane.b32.xlu0 %v488, 32
    %v491 = vpop.permute.xlu0 %490
    %v493 = vadd.f32 %v483, %v491
    %v494 = vtanh.pop %v493
    %496 = vrot.lane.b32.xlu0 %v494, 64
    %v497 = vpop.permute.xlu0 %496
    %v499 = vmul.f32 %v477, %v497
    %501 = vrot.lane.b32.xlu0 %v499, 32
    %v502 = vpop.permute.xlu0 %501
    %504 = vrot.lane.b32.xlu0 %v499, 64
    %v505 = vpop.permute.xlu0 %504
    %v507 = vsel %vm252, %v502, %v505
    %v508 = vmul.f32 %v161, %v507
    %v509 = vmul.f32 %v161, %v426
    %v510 = vsub.f32 %v426, %v509
    %v511 = vadd.f32 %v510, %v508
    %v512 = vsub.f32 %v493, %v481
    %514 = vrot.lane.b32.xlu0 %v512, 96
    %v515 = vpop.permute.xlu0 %514
    %v517 = vmul.f32 %v169, %v515
    %v518 = vadd.f32 %v433, %v517
    %v519 = vadd.f32 %v147, %v173
    %v521 = vsel %vm183, %v511, 0
    %523 = vmatpush.msra.mxu0 0.0
    %524 = vmatpush.msra.mxu0 0.0
    %525 = vmatpush.msra.mxu0 0.0
    %526 = vmatpush.msra.mxu0 0.0
    %527 = vmatpush.msra.mxu0 0.0
    %528 = vmatpush.msra.mxu0 0.0
    %529 = vmatpush.msra.mxu0 0.0
    %530 = vmatpush.msra.mxu0 0.0
    %531 = vmatpush.msra.mxu0 %v181
    %532 = vmatpush.msra.mxu0 %v180
    %533 = vmatpush.msra.mxu0 %v179
    %534 = vmatpush.msra.mxu0 %v178
    %535 = vmatpush.msra.mxu0 %v177
    %536 = vmatpush.msra.mxu0 %v176
    %537 = vmatpush.msra.mxu0 %v175
    %538 = vmatpush.msra.mxu0 %v174
    %539 = vmatmul.f32.gmra.mxu0 %v521
    %v540 = vpop.f32.mrf.mxu0
    %v541 = vadd.f32 0.0, %v540
    %542 = vdwg.mxu0
    %v543 = vadd.f32 %v519, %v541
    %v544 = vxor.u32 %v543, 2147483648
    %v545 = vmul.f32 %v544, 1.442695
    %v546 = vpow.pop %v545
    %v547 = vadd.f32 %v546, 1.0
    %v548 = vrcp.pop %v547
    %v549 = vmul.f32 %v547, %v548
    %v550 = vsub.f32 1.0, %v549
    %v551 = vmul.f32 %v548, %v550
    %v552 = vadd.f32 %v548, %v551
    %vm553 = vweird.f32 %v547
    %vm554 = vweird.f32 %v548
    %vm555 = vmor %vm553, %vm554
    %v556 = vsel %vm555, %v548, %v552
    %v557 = vand.u32 2147483647, %v547
    %vm558 = vcmp.eq.f32.partialorder %v557, 8.507059e+37
    %v559 = vand.u32 %v547, 2147483648
    %v560 = vor.u32 1.1754944e-38, %v559
    %v561 = vsel %vm558, %v560, %v556
    %v562 = vmul.f32 1.0, %v561
    %v563 = vtanh.pop %v543
    %565 = vrot.lane.b32.xlu0 %v518, 32
    %v566 = vpop.permute.xlu0 %565
    %v568 = vmul.f32 %v562, %v566
    %570 = vrot.lane.b32.xlu0 %v563, 64
    %v571 = vpop.permute.xlu0 %570
    %v573 = vmul.f32 %v562, %v571
    %575 = vrot.lane.b32.xlu0 %v573, 32
    %v576 = vpop.permute.xlu0 %575
    %v578 = vadd.f32 %v568, %v576
    %v579 = vtanh.pop %v578
    %581 = vrot.lane.b32.xlu0 %v579, 64
    %v582 = vpop.permute.xlu0 %581
    %v584 = vmul.f32 %v562, %v582
    %586 = vrot.lane.b32.xlu0 %v584, 32
    %v587 = vpop.permute.xlu0 %586
    %589 = vrot.lane.b32.xlu0 %v584, 64
    %v590 = vpop.permute.xlu0 %589
    %v592 = vsel %vm252, %v587, %v590
    %v593 = vmul.f32 %v162, %v592
    %v594 = vmul.f32 %v162, %v511
    %v595 = vsub.f32 %v511, %v594
    %v596 = vadd.f32 %v595, %v593
    %v597 = vsub.f32 %v578, %v566
    %599 = vrot.lane.b32.xlu0 %v597, 96
    %v600 = vpop.permute.xlu0 %599
    %v602 = vmul.f32 %v170, %v600
    %v603 = vadd.f32 %v518, %v602
    %v604 = vadd.f32 %v150, %v173
    %v606 = vsel %vm183, %v596, 0
    %608 = vmatpush.msra.mxu0 0.0
    %609 = vmatpush.msra.mxu0 0.0
    %610 = vmatpush.msra.mxu0 0.0
    %611 = vmatpush.msra.mxu0 0.0
    %612 = vmatpush.msra.mxu0 0.0
    %613 = vmatpush.msra.mxu0 0.0
    %614 = vmatpush.msra.mxu0 0.0
    %615 = vmatpush.msra.mxu0 0.0
    %616 = vmatpush.msra.mxu0 %v181
    %617 = vmatpush.msra.mxu0 %v180
    %618 = vmatpush.msra.mxu0 %v179
    %619 = vmatpush.msra.mxu0 %v178
    %620 = vmatpush.msra.mxu0 %v177
    %621 = vmatpush.msra.mxu0 %v176
    %622 = vmatpush.msra.mxu0 %v175
    %623 = vmatpush.msra.mxu0 %v174
    %624 = vmatmul.f32.gmra.mxu0 %v606
    %v625 = vpop.f32.mrf.mxu0
    %v626 = vadd.f32 0.0, %v625
    %627 = vdwg.mxu0
    %v628 = vadd.f32 %v604, %v626
    %v629 = vxor.u32 %v628, 2147483648
    %v630 = vmul.f32 %v629, 1.442695
    %v631 = vpow.pop %v630
    %v632 = vadd.f32 %v631, 1.0
    %v633 = vrcp.pop %v632
    %v634 = vmul.f32 %v632, %v633
    %v635 = vsub.f32 1.0, %v634
    %v636 = vmul.f32 %v633, %v635
    %v637 = vadd.f32 %v633, %v636
    %vm638 = vweird.f32 %v632
    %vm639 = vweird.f32 %v633
    %vm640 = vmor %vm638, %vm639
    %v641 = vsel %vm640, %v633, %v637
    %v642 = vand.u32 2147483647, %v632
    %vm643 = vcmp.eq.f32.partialorder %v642, 8.507059e+37
    %v644 = vand.u32 %v632, 2147483648
    %v645 = vor.u32 1.1754944e-38, %v644
    %v646 = vsel %vm643, %v645, %v641
    %v647 = vmul.f32 1.0, %v646
    %v648 = vtanh.pop %v628
    %650 = vrot.lane.b32.xlu0 %v603, 32
    %v651 = vpop.permute.xlu0 %650
    %v653 = vmul.f32 %v647, %v651
    %655 = vrot.lane.b32.xlu0 %v648, 64
    %v656 = vpop.permute.xlu0 %655
    %v658 = vmul.f32 %v647, %v656
    %660 = vrot.lane.b32.xlu0 %v658, 32
    %v661 = vpop.permute.xlu0 %660
    %v663 = vadd.f32 %v653, %v661
    %v664 = vtanh.pop %v663
    %666 = vrot.lane.b32.xlu0 %v664, 64
    %v667 = vpop.permute.xlu0 %666
    %v669 = vmul.f32 %v647, %v667
    %671 = vrot.lane.b32.xlu0 %v669, 32
    %v672 = vpop.permute.xlu0 %671
    %674 = vrot.lane.b32.xlu0 %v669, 64
    %v675 = vpop.permute.xlu0 %674
    %v677 = vsel %vm252, %v672, %v675
    %v678 = vmul.f32 %v163, %v677
    %v679 = vmul.f32 %v163, %v596
    %v680 = vsub.f32 %v596, %v679
    %v681 = vadd.f32 %v680, %v678
    %v682 = vsub.f32 %v663, %v651
    %684 = vrot.lane.b32.xlu0 %v682, 96
    %v685 = vpop.permute.xlu0 %684
    %v687 = vmul.f32 %v171, %v685
    %v688 = vadd.f32 %v603, %v687
    %v689 = vadd.f32 %v153, %v173
    %v691 = vsel %vm183, %v681, 0
    %693 = vmatpush.msra.mxu0 0.0
    %694 = vmatpush.msra.mxu0 0.0
    %695 = vmatpush.msra.mxu0 0.0
    %696 = vmatpush.msra.mxu0 0.0
    %697 = vmatpush.msra.mxu0 0.0
    %698 = vmatpush.msra.mxu0 0.0
    %699 = vmatpush.msra.mxu0 0.0
    %700 = vmatpush.msra.mxu0 0.0
    %701 = vmatpush.msra.mxu0 %v181
    %702 = vmatpush.msra.mxu0 %v180
    %703 = vmatpush.msra.mxu0 %v179
    %704 = vmatpush.msra.mxu0 %v178
    %705 = vmatpush.msra.mxu0 %v177
    %706 = vmatpush.msra.mxu0 %v176
    %707 = vmatpush.msra.mxu0 %v175
    %708 = vmatpush.msra.mxu0 %v174
    %709 = vmatmul.f32.gmra.mxu0 %v691
    %v710 = vpop.f32.mrf.mxu0
    %v711 = vadd.f32 0.0, %v710
    %712 = vdwg.mxu0
    %v713 = vadd.f32 %v689, %v711
    %v714 = vxor.u32 %v713, 2147483648
    %v715 = vmul.f32 %v714, 1.442695
    %v716 = vpow.pop %v715
    %v717 = vadd.f32 %v716, 1.0
    %v718 = vrcp.pop %v717
    %v719 = vmul.f32 %v717, %v718
    %v720 = vsub.f32 1.0, %v719
    %v721 = vmul.f32 %v718, %v720
    %v722 = vadd.f32 %v718, %v721
    %vm723 = vweird.f32 %v717
    %vm724 = vweird.f32 %v718
    %vm725 = vmor %vm723, %vm724
    %v726 = vsel %vm725, %v718, %v722
    %v727 = vand.u32 2147483647, %v717
    %vm728 = vcmp.eq.f32.partialorder %v727, 8.507059e+37
    %v729 = vand.u32 %v717, 2147483648
    %v730 = vor.u32 1.1754944e-38, %v729
    %v731 = vsel %vm728, %v730, %v726
    %v732 = vmul.f32 1.0, %v731
    %v733 = vtanh.pop %v713
    %735 = vrot.lane.b32.xlu0 %v688, 32
    %v736 = vpop.permute.xlu0 %735
    %v738 = vmul.f32 %v732, %v736
    %740 = vrot.lane.b32.xlu0 %v733, 64
    %v741 = vpop.permute.xlu0 %740
    %v743 = vmul.f32 %v732, %v741
    %745 = vrot.lane.b32.xlu0 %v743, 32
    %v746 = vpop.permute.xlu0 %745
    %v748 = vadd.f32 %v738, %v746
    %v749 = vtanh.pop %v748
    %751 = vrot.lane.b32.xlu0 %v749, 64
    %v752 = vpop.permute.xlu0 %751
    %v754 = vmul.f32 %v732, %v752
    %756 = vrot.lane.b32.xlu0 %v754, 32
    %v757 = vpop.permute.xlu0 %756
    %759 = vrot.lane.b32.xlu0 %v754, 64
    %v760 = vpop.permute.xlu0 %759
    %v762 = vsel %vm252, %v757, %v760
    %v763 = vmul.f32 %v164, %v762
    %v764 = vmul.f32 %v164, %v681
    %v765 = vsub.f32 %v681, %v764
    %v766 = vadd.f32 %v765, %v763
    %v767 = vsub.f32 %v748, %v736
    %769 = vrot.lane.b32.xlu0 %v767, 96
    %v770 = vpop.permute.xlu0 %769
    %v772 = vmul.f32 %v172, %v770
    %v773 = vadd.f32 %v688, %v772
    %v774 = vadd.f32 %v156, %v173
    %v776 = vsel %vm183, %v766, 0
    %778 = vmatpush.msra.mxu0 0.0
    %779 = vmatpush.msra.mxu0 0.0
    %780 = vmatpush.msra.mxu0 0.0
    %781 = vmatpush.msra.mxu0 0.0
    %782 = vmatpush.msra.mxu0 0.0
    %783 = vmatpush.msra.mxu0 0.0
    %784 = vmatpush.msra.mxu0 0.0
    %785 = vmatpush.msra.mxu0 0.0
    %786 = vmatpush.msra.mxu0 %v181
    %787 = vmatpush.msra.mxu0 %v180
    %788 = vmatpush.msra.mxu0 %v179
    %789 = vmatpush.msra.mxu0 %v178
    %790 = vmatpush.msra.mxu0 %v177
    %791 = vmatpush.msra.mxu0 %v176
    %792 = vmatpush.msra.mxu0 %v175
    %793 = vmatpush.msra.mxu0 %v174
    %794 = vmatmul.f32.gmra.mxu0 %v776
    %v795 = vpop.f32.mrf.mxu0
    %v796 = vadd.f32 0.0, %v795
    %797 = vdwg.mxu0
    %v798 = vadd.f32 %v774, %v796
    %v799 = vxor.u32 %v798, 2147483648
    %v800 = vmul.f32 %v799, 1.442695
    %v801 = vpow.pop %v800
    %v802 = vadd.f32 %v801, 1.0
    %v803 = vrcp.pop %v802
    %v804 = vmul.f32 %v802, %v803
    %v805 = vsub.f32 1.0, %v804
    %v806 = vmul.f32 %v803, %v805
    %v807 = vadd.f32 %v803, %v806
    %vm808 = vweird.f32 %v802
    %vm809 = vweird.f32 %v803
    %vm810 = vmor %vm808, %vm809
    %v811 = vsel %vm810, %v803, %v807
    %v812 = vand.u32 2147483647, %v802
    %vm813 = vcmp.eq.f32.partialorder %v812, 8.507059e+37
    %v814 = vand.u32 %v802, 2147483648
    %v815 = vor.u32 1.1754944e-38, %v814
    %v816 = vsel %vm813, %v815, %v811
    %v817 = vmul.f32 1.0, %v816
    %v818 = vtanh.pop %v798
    %820 = vrot.lane.b32.xlu0 %v773, 32
    %v821 = vpop.permute.xlu0 %820
    %v823 = vmul.f32 %v817, %v821
    %825 = vrot.lane.b32.xlu0 %v818, 64
    %v826 = vpop.permute.xlu0 %825
    %v828 = vmul.f32 %v817, %v826
    %830 = vrot.lane.b32.xlu0 %v828, 32
    %v831 = vpop.permute.xlu0 %830
    %v833 = vadd.f32 %v823, %v831
    %v834 = vtanh.pop %v833
    %836 = vrot.lane.b32.xlu0 %v834, 64
    %v837 = vpop.permute.xlu0 %836
    %v839 = vmul.f32 %v817, %v837
    %841 = vrot.lane.b32.xlu0 %v839, 32
    %v842 = vpop.permute.xlu0 %841
    %844 = vrot.lane.b32.xlu0 %v839, 64
    %v845 = vpop.permute.xlu0 %844
    %v847 = vsel %vm252, %v842, %v845
    %v848 = vmul.f32 %v165, %v847
    %v849 = vld [vmem:[#allocation7] sm:$0xff]
    %v850 = vld [vmem:[#allocation7 + $0x8] sm:$0xff]
    %v852 = vsel %vm183, %v849, 0
    %v855 = vsel %vm183, %v850, 0
    %857 = vmatpush.msra.mxu0 0.0
    %858 = vmatpush.msra.mxu0 0.0
    %859 = vmatpush.msra.mxu0 0.0
    %860 = vmatpush.msra.mxu0 0.0
    %861 = vmatpush.msra.mxu0 0.0
    %862 = vmatpush.msra.mxu0 0.0
    %863 = vmatpush.msra.mxu0 0.0
    %864 = vmatpush.msra.mxu0 0.0
    %865 = vmatpush.msra.mxu0 %v848
    %866 = vmatpush.msra.mxu0 %v763
    %867 = vmatpush.msra.mxu0 %v678
    %868 = vmatpush.msra.mxu0 %v593
    %869 = vmatpush.msra.mxu0 %v508
    %870 = vmatpush.msra.mxu0 %v423
    %871 = vmatpush.msra.mxu0 %v338
    %872 = vmatpush.msra.mxu0 %v254
    %873 = vmatmul.f32.gmra.mxu0 %v852
    %v874 = vpop.f32.mrf.mxu0
    %v875 = vadd.f32 0.0, %v874
    %876 = vmatmul.f32.gmra.mxu0 %v855
    %v877 = vpop.f32.mrf.mxu0
    %v878 = vadd.f32 0.0, %v877
    %879 = vdwg.mxu0
    %v880 = vld [vmem:[#allocation5] sm:$0xff]
    %v881 = vld [vmem:[#allocation5 + $0x8] sm:$0xff]
    %v882 = vld [vmem:[#allocation5 + $0x10] sm:$0xff]
    %v883 = vld [vmem:[#allocation5 + $0x18] sm:$0xff]
    %v884 = vld [vmem:[#allocation5 + $0x20] sm:$0xff]
    %v885 = vld [vmem:[#allocation5 + $0x28] sm:$0xff]
    %v886 = vld [vmem:[#allocation5 + $0x30] sm:$0xff]
    %v887 = vld [vmem:[#allocation5 + $0x38] sm:$0xff]
    %v888 = vld [vmem:[%s8] sm:$0x1]
    %v890 = vperm.slane %v888, 0
    %v893 = vsel %vm183, %v875, 0
    %v896 = vsel %vm183, %v878, 0
    %898 = vmatpush.msra.mxu0 0.0
    %899 = vmatpush.msra.mxu0 0.0
    %900 = vmatpush.msra.mxu0 0.0
    %901 = vmatpush.msra.mxu0 0.0
    %902 = vmatpush.msra.mxu0 0.0
    %903 = vmatpush.msra.mxu0 0.0
    %904 = vmatpush.msra.mxu0 0.0
    %905 = vmatpush.msra.mxu0 0.0
    %906 = vmatpush.msra.mxu0 %v887
    %907 = vmatpush.msra.mxu0 %v886
    %908 = vmatpush.msra.mxu0 %v885
    %909 = vmatpush.msra.mxu0 %v884
    %910 = vmatpush.msra.mxu0 %v883
    %911 = vmatpush.msra.mxu0 %v882
    %912 = vmatpush.msra.mxu0 %v881
    %913 = vmatpush.msra.mxu0 %v880
    %914 = vmatmul.f32.gmra.mxu0 %v893
    %v915 = vpop.f32.mrf.mxu0
    %v916 = vadd.f32 %v890, %v915
    %917 = vmatmul.f32.gmra.mxu0 %v896
    %v918 = vpop.f32.mrf.mxu0
    %v919 = vadd.f32 %v890, %v918
    %920 = vdwg.mxu0
    %921 = vst [vmem:[#allocation8] sm:$0xff] %v916
    %922 = vst [vmem:[#allocation8 + $0x8] sm:$0xff] %v919
    // Predicated region
    $region50: #{tpu_custom_call.1} parent=1 // pred_check
      _
    $region51: #{tpu_custom_call.1} parent=1 // pred_check_branch
      %924 = sbr.rel (0) target = $region53
    $region52: #{tpu_custom_call.1} parent=1 // pred_region
      %926 = vsyncadd [#allocation4], 0
      %s927 = sshll.u32 [#allocation8], 4
      %s928 = int_to_ptr.vmem [resolvable:$true] %s927
      %s929 = sshll.u32 %s9, 4
      %s930 = int_to_ptr.hbm [resolvable:$true] %s929
      %935 = dma.vmem_to_hbm [thread:$0]  %s928, 256, %s930, [#allocation4], 128, 128, 8
    $region53: #{tpu_custom_call.1} parent=1 // pred_fallthru
      _
    // Predicated region
    $region54: #{tpu_custom_call.1} parent=1 // pred_check
      _
    $region55: #{tpu_custom_call.1} parent=1 // pred_check_branch
      %937 = sbr.rel (0) target = $region57
    $region56: #{tpu_custom_call.1} parent=1 // pred_region
      %939 = dma.done [#allocation4], 256
    $region57: #{tpu_custom_call.1} parent=1 // pred_fallthru
      _
    %940 = vsyncpa [#allocation3], 1
    %941 = vsyncpa [#allocation6], 1
    %942 = vsyncpa [#allocation4], 1

</llo_original>
